<compile_context>
chip_gen: v5e
topology: v5e:2x2
jax: 0.10.0
libtpu: 0.0.40
codegen_flags: <defaults>
</compile_context>

<pallas_src>
import functools

import jax
import jax.numpy as jnp
from jax.experimental import pallas as pl
from jax.experimental.pallas import tpu as pltpu


def _spatial_attention_kernel(w_ref, coord_ref, x_ref, o_ref, *, k_size, H, W,
                              use_roll):
    """One batch-tile per grid step.

    w_ref     : SMEM (2*k*k + 1,) f32  [max-branch taps, avg-branch taps, bias]
    coord_ref : VMEM (2, HW) int32     [row index; col index] per flat position
    x_ref     : VMEM (Bt, C, HW)       input tile
    o_ref     : VMEM (Bt, C, HW)       attention map output tile
    """
    Bt, C, HW = x_ref.shape
    pad = (k_size - 1) // 2
    k2 = k_size * k_size

    x = x_ref[...]                                          # (Bt, C, HW) native dtype
    # ---- channel-wise max / mean (sublane-direction reduce, f32 accumulate) ----
    mx = jnp.max(x, axis=1).astype(jnp.float32)             # (Bt, HW)
    av = jnp.sum(x, axis=1, dtype=jnp.float32) * (1.0 / C)  # (Bt, HW)

    # ---- tap shift: XLU lane-roll (preferred) or padded static slice fallback ----
    if use_roll:
        def mx_s(d):
            return mx if d == 0 else pltpu.roll(mx, shift=(-d) % HW, axis=1)

        def av_s(d):
            return av if d == 0 else pltpu.roll(av, shift=(-d) % HW, axis=1)
    else:
        off = pad * W + pad
        zpad = jnp.zeros((Bt, off), jnp.float32)
        mx_p = jnp.concatenate([zpad, mx, zpad], axis=1)
        av_p = jnp.concatenate([zpad, av, zpad], axis=1)

        def mx_s(d):
            return mx_p[:, off + d: off + d + HW]

        def av_s(d):
            return av_p[:, off + d: off + d + HW]

    # ---- hoisted boundary masks (valid = not wrapped / not out-of-image) ----
    hh = coord_ref[0:1, :]                                  # (1, HW) int32
    ww = coord_ref[1:2, :]
    row_ok = {}
    col_ok = {}
    for s in range(1, pad + 1):
        row_ok[-s] = hh >= s
        row_ok[s] = hh < (H - s)
        col_ok[-s] = ww >= s
        col_ok[s] = ww < (W - s)

    # ---- kxk "same" conv on the flat spatial axis ----
    acc = jnp.full((Bt, HW), w_ref[2 * k2], jnp.float32)    # start from the bias
    for i in range(k_size):
        for j in range(k_size):
            dh, dw = i - pad, j - pad
            d = dh * W + dw
            tap = (w_ref[i * k_size + j] * mx_s(d)
                   + w_ref[k2 + i * k_size + j] * av_s(d))
            conds = []
            if dh != 0:
                conds.append(row_ok[dh])
            if dw != 0:
                conds.append(col_ok[dw])
            if conds:
                valid = conds[0]
                for c in conds[1:]:
                    valid = valid & c
                tap = jnp.where(valid, tap, 0.0)
            acc = acc + tap

    # ---- sigmoid gate (EUP), cast BEFORE the channel broadcast, single store ----
    att = jax.nn.sigmoid(acc).astype(o_ref.dtype)           # (Bt, HW)
    o_ref[...] = jnp.broadcast_to(att[:, None, :], (Bt, C, HW))


def spatial_attention_forward(x, weight, bias, k_size=3):
    """x: (B, C, H, W); weight: (1, 2, k, k) Conv2d weight; bias: (1,)."""
    B, C, H, W = x.shape
    HW = H * W
    xf = x.reshape(B, C, HW)

    # taps for the max branch, then the avg branch, then the bias
    w_flat = jnp.concatenate([
        weight[0, 0].reshape(-1),
        weight[0, 1].reshape(-1),
        bias.reshape(-1),
    ]).astype(jnp.float32)

    # precomputed (row, col) index per flat spatial position (loaded once)
    hh = jnp.repeat(jnp.arange(H, dtype=jnp.int32), W)
    ww = jnp.tile(jnp.arange(W, dtype=jnp.int32), H)
    coords = jnp.stack([hh, ww], axis=0)                     # (2, HW) int32

    # ---- generation-aware VMEM budgeting ----
    itemsize = x.dtype.itemsize
    try:
        vmem_phys = int(pltpu.get_tpu_info().vmem_capacity_bytes)
    except Exception:
        vmem_phys = 64 * 1024 * 1024          # conservative (fits v7x per-core)

    sub_mult = 8 * max(1, 4 // itemsize)      # f32: 8, bf16: 16, int8/fp8: 32
    c_pad = pl.cdiv(C, sub_mult) * sub_mult
    hw_pad = pl.cdiv(HW, 128) * 128
    per_batch = c_pad * hw_pad * itemsize     # one physically padded (C, HW) slab
    temps_per_batch = 12 * hw_pad * 4         # f32 conv temporaries (generous)

    budget = int(0.70 * vmem_phys) - (2 << 20)        # headroom: coords/weights/misc
    denom = 4 * per_batch + temps_per_batch           # 2x-buffered in + out + temps
    bt = max(1, budget // max(denom, 1))
    bt = min(bt, B)
    if B >= 2:
        bt = min(bt, max(1, B // 2))          # >= 2 grid steps: both v7x TCs busy
    grid = pl.cdiv(B, bt)

    vmem_need = bt * denom + (2 << 20)
    vmem_limit = int(min(max(vmem_need, 32 * 1024 * 1024), 0.9 * vmem_phys))

    use_roll = (HW % 128 == 0)                # lane rolls need a 128-multiple axis

    out = pl.pallas_call(
        functools.partial(_spatial_attention_kernel, k_size=k_size, H=H, W=W,
                          use_roll=use_roll),
        out_shape=jax.ShapeDtypeStruct((B, C, HW), x.dtype),
        grid=(grid,),
        in_specs=[
            pl.BlockSpec(memory_space=pltpu.MemorySpace.SMEM),   # conv taps + bias
            pl.BlockSpec((2, HW), lambda b: (0, 0)),             # coord table (once)
            pl.BlockSpec((bt, C, HW), lambda b: (b, 0, 0)),      # batch tile of x
        ],
        out_specs=pl.BlockSpec((bt, C, HW), lambda b: (b, 0, 0)),
        compiler_params=pltpu.CompilerParams(
            dimension_semantics=("parallel",),
            vmem_limit_bytes=vmem_limit,
        ),
    )(w_flat, coords, xf)
    return out.reshape(B, C, H, W)


def spatial_attention_reference(x, weight, bias, k_size=3):
    """Pure-JAX reference matching the PyTorch module."""
    B, C, H, W = x.shape
    pad = (k_size - 1) // 2
    mx = jnp.max(x, axis=1, keepdims=True)
    av = jnp.mean(x, axis=1, keepdims=True)
    pool = jnp.concatenate([mx, av], axis=1)                  # (B, 2, H, W)
    conv = jax.lax.conv_general_dilated(
        pool, weight, window_strides=(1, 1),
        padding=((pad, pad), (pad, pad)),
        dimension_numbers=("NCHW", "OIHW", "NCHW"))
    conv = conv + bias.reshape(1, -1, 1, 1)
    att = jax.nn.sigmoid(conv)
    return jnp.broadcast_to(att, (B, C, H, W))


if __name__ == "__main__":
    key = jax.random.PRNGKey(0)
    kx, kw, kb = jax.random.split(key, 3)

    B, C, H, W = 2, 4, 16, 16
    k_size = 3

    x = jax.random.normal(kx, (B, C, H, W), dtype=jnp.float32)
    # Conv2d default init: U(-sqrt(1/(in_ch*k*k)), +sqrt(1/(in_ch*k*k)))
    fan_in = 2 * k_size * k_size
    bound = (1.0 / fan_in) ** 0.5
    weight = jax.random.uniform(kw, (1, 2, k_size, k_size), dtype=jnp.float32,
                                minval=-bound, maxval=bound)
    bias = jax.random.uniform(kb, (1,), dtype=jnp.float32,
                              minval=-bound, maxval=bound)

    out = spatial_attention_forward(x, weight, bias, k_size=k_size)
    out = jax.block_until_ready(out)

    ref = spatial_attention_reference(x, weight, bias, k_size=k_size)
    assert out.shape == x.shape and out.dtype == x.dtype
    assert jnp.allclose(out, ref, atol=1e-5, rtol=1e-5), "mismatch vs reference"

    print("KERNEL_OK")
</pallas_src>

<mosaic_0001>
module attributes {stable_mosaic.version = 11 : i64} {
  func.func @_spatial_attention_kernel(%arg0: i32, %arg1: memref<19xf32, #tpu.memory_space<smem>>, %arg2: memref<2x256xi32, #tpu.memory_space<vmem>>, %arg3: memref<1x4x256xf32, #tpu.memory_space<vmem>>, %arg4: memref<1x4x256xf32, #tpu.memory_space<vmem>>) attributes {dimension_semantics = [#tpu.dimension_semantics<parallel>], iteration_bounds = array<i64: 2>, scalar_prefetch = 0 : i64, scratch_operands = 0 : i64, tpu.core_type = #tpu.core_type<tc>, window_params = [{transform_indices = @transform_0, window_bounds = array<i64: 19>}, {pipeline_mode = #tpu.pipeline_mode<synchronous>, transform_indices = @transform_1, window_bounds = array<i64: 2, 256>}, {transform_indices = @transform_2, window_bounds = array<i64: 1, 4, 256>}, {transform_indices = @transform_3, window_bounds = array<i64: 1, 4, 256>}]} {
    %c0 = arith.constant 0 : index
    %c0_0 = arith.constant 0 : index
    %c0_1 = arith.constant 0 : index
    %0 = vector.load %arg3[%c0, %c0_0, %c0_1] : memref<1x4x256xf32, #tpu.memory_space<vmem>>, vector<1x4x256xf32>
    %cst = arith.constant dense<0xFF800000> : vector<1x256xf32>
    %1 = vector.multi_reduction <maximumf>, %0, %cst [1] : vector<1x4x256xf32> to vector<1x256xf32>
    %cst_2 = arith.constant dense<0.000000e+00> : vector<1x256xf32>
    %2 = vector.multi_reduction <add>, %0, %cst_2 [1] : vector<1x4x256xf32> to vector<1x256xf32>
    %cst_3 = arith.constant 2.500000e-01 : f32
    %3 = vector.broadcast %cst_3 : f32 to vector<1x256xf32>
    %4 = arith.mulf %2, %3 : vector<1x256xf32>
    %c0_4 = arith.constant 0 : index
    %c0_5 = arith.constant 0 : index
    %5 = vector.load %arg2[%c0_4, %c0_5] : memref<2x256xi32, #tpu.memory_space<vmem>>, vector<1x256xi32>
    %c1 = arith.constant 1 : index
    %c0_6 = arith.constant 0 : index
    %6 = vector.load %arg2[%c1, %c0_6] : memref<2x256xi32, #tpu.memory_space<vmem>>, vector<1x256xi32>
    %c1_i32 = arith.constant 1 : i32
    %7 = vector.broadcast %c1_i32 : i32 to vector<1x256xi32>
    %8 = arith.cmpi sge, %5, %7 : vector<1x256xi32>
    %c15_i32 = arith.constant 15 : i32
    %9 = vector.broadcast %c15_i32 : i32 to vector<1x256xi32>
    %10 = arith.cmpi slt, %5, %9 : vector<1x256xi32>
    %c1_i32_7 = arith.constant 1 : i32
    %11 = vector.broadcast %c1_i32_7 : i32 to vector<1x256xi32>
    %12 = arith.cmpi sge, %6, %11 : vector<1x256xi32>
    %c15_i32_8 = arith.constant 15 : i32
    %13 = vector.broadcast %c15_i32_8 : i32 to vector<1x256xi32>
    %14 = arith.cmpi slt, %6, %13 : vector<1x256xi32>
    %c18 = arith.constant 18 : index
    %15 = memref.load %arg1[%c18] : memref<19xf32, #tpu.memory_space<smem>>
    %16 = vector.broadcast %15 : f32 to vector<1x256xf32>
    %c0_9 = arith.constant 0 : index
    %17 = memref.load %arg1[%c0_9] : memref<19xf32, #tpu.memory_space<smem>>
    %c17_i32 = arith.constant 17 : i32
    %18 = tpu.dynamic_rotate %1 by %c17_i32 dim 1 : vector<1x256xf32>, i32 -> vector<1x256xf32>
    %19 = vector.broadcast %17 : f32 to vector<1x256xf32>
    %20 = arith.mulf %19, %18 : vector<1x256xf32>
    %c9 = arith.constant 9 : index
    %21 = memref.load %arg1[%c9] : memref<19xf32, #tpu.memory_space<smem>>
    %c17_i32_10 = arith.constant 17 : i32
    %22 = tpu.dynamic_rotate %4 by %c17_i32_10 dim 1 : vector<1x256xf32>, i32 -> vector<1x256xf32>
    %23 = vector.broadcast %21 : f32 to vector<1x256xf32>
    %24 = arith.mulf %23, %22 : vector<1x256xf32>
    %25 = arith.addf %20, %24 : vector<1x256xf32>
    %26 = arith.andi %8, %12 : vector<1x256xi1>
    %cst_11 = arith.constant 0.000000e+00 : f32
    %27 = vector.broadcast %cst_11 : f32 to vector<1x256xf32>
    %28 = arith.select %26, %25, %27 : vector<1x256xi1>, vector<1x256xf32>
    %29 = arith.addf %16, %28 : vector<1x256xf32>
    %c1_12 = arith.constant 1 : index
    %30 = memref.load %arg1[%c1_12] : memref<19xf32, #tpu.memory_space<smem>>
    %c16_i32 = arith.constant 16 : i32
    %31 = tpu.dynamic_rotate %1 by %c16_i32 dim 1 : vector<1x256xf32>, i32 -> vector<1x256xf32>
    %32 = vector.broadcast %30 : f32 to vector<1x256xf32>
    %33 = arith.mulf %32, %31 : vector<1x256xf32>
    %c10 = arith.constant 10 : index
    %34 = memref.load %arg1[%c10] : memref<19xf32, #tpu.memory_space<smem>>
    %c16_i32_13 = arith.constant 16 : i32
    %35 = tpu.dynamic_rotate %4 by %c16_i32_13 dim 1 : vector<1x256xf32>, i32 -> vector<1x256xf32>
    %36 = vector.broadcast %34 : f32 to vector<1x256xf32>
    %37 = arith.mulf %36, %35 : vector<1x256xf32>
    %38 = arith.addf %33, %37 : vector<1x256xf32>
    %cst_14 = arith.constant 0.000000e+00 : f32
    %39 = vector.broadcast %cst_14 : f32 to vector<1x256xf32>
    %40 = arith.select %8, %38, %39 : vector<1x256xi1>, vector<1x256xf32>
    %41 = arith.addf %29, %40 : vector<1x256xf32>
    %c2 = arith.constant 2 : index
    %42 = memref.load %arg1[%c2] : memref<19xf32, #tpu.memory_space<smem>>
    %c15_i32_15 = arith.constant 15 : i32
    %43 = tpu.dynamic_rotate %1 by %c15_i32_15 dim 1 : vector<1x256xf32>, i32 -> vector<1x256xf32>
    %44 = vector.broadcast %42 : f32 to vector<1x256xf32>
    %45 = arith.mulf %44, %43 : vector<1x256xf32>
    %c11 = arith.constant 11 : index
    %46 = memref.load %arg1[%c11] : memref<19xf32, #tpu.memory_space<smem>>
    %c15_i32_16 = arith.constant 15 : i32
    %47 = tpu.dynamic_rotate %4 by %c15_i32_16 dim 1 : vector<1x256xf32>, i32 -> vector<1x256xf32>
    %48 = vector.broadcast %46 : f32 to vector<1x256xf32>
    %49 = arith.mulf %48, %47 : vector<1x256xf32>
    %50 = arith.addf %45, %49 : vector<1x256xf32>
    %51 = arith.andi %8, %14 : vector<1x256xi1>
    %cst_17 = arith.constant 0.000000e+00 : f32
    %52 = vector.broadcast %cst_17 : f32 to vector<1x256xf32>
    %53 = arith.select %51, %50, %52 : vector<1x256xi1>, vector<1x256xf32>
    %54 = arith.addf %41, %53 : vector<1x256xf32>
    %c3 = arith.constant 3 : index
    %55 = memref.load %arg1[%c3] : memref<19xf32, #tpu.memory_space<smem>>
    %c1_i32_18 = arith.constant 1 : i32
    %56 = tpu.dynamic_rotate %1 by %c1_i32_18 dim 1 : vector<1x256xf32>, i32 -> vector<1x256xf32>
    %57 = vector.broadcast %55 : f32 to vector<1x256xf32>
    %58 = arith.mulf %57, %56 : vector<1x256xf32>
    %c12 = arith.constant 12 : index
    %59 = memref.load %arg1[%c12] : memref<19xf32, #tpu.memory_space<smem>>
    %c1_i32_19 = arith.constant 1 : i32
    %60 = tpu.dynamic_rotate %4 by %c1_i32_19 dim 1 : vector<1x256xf32>, i32 -> vector<1x256xf32>
    %61 = vector.broadcast %59 : f32 to vector<1x256xf32>
    %62 = arith.mulf %61, %60 : vector<1x256xf32>
    %63 = arith.addf %58, %62 : vector<1x256xf32>
    %cst_20 = arith.constant 0.000000e+00 : f32
    %64 = vector.broadcast %cst_20 : f32 to vector<1x256xf32>
    %65 = arith.select %12, %63, %64 : vector<1x256xi1>, vector<1x256xf32>
    %66 = arith.addf %54, %65 : vector<1x256xf32>
    %c4 = arith.constant 4 : index
    %67 = memref.load %arg1[%c4] : memref<19xf32, #tpu.memory_space<smem>>
    %68 = vector.broadcast %67 : f32 to vector<1x256xf32>
    %69 = arith.mulf %68, %1 : vector<1x256xf32>
    %c13 = arith.constant 13 : index
    %70 = memref.load %arg1[%c13] : memref<19xf32, #tpu.memory_space<smem>>
    %71 = vector.broadcast %70 : f32 to vector<1x256xf32>
    %72 = arith.mulf %71, %4 : vector<1x256xf32>
    %73 = arith.addf %69, %72 : vector<1x256xf32>
    %74 = arith.addf %66, %73 : vector<1x256xf32>
    %c5 = arith.constant 5 : index
    %75 = memref.load %arg1[%c5] : memref<19xf32, #tpu.memory_space<smem>>
    %c255_i32 = arith.constant 255 : i32
    %76 = tpu.dynamic_rotate %1 by %c255_i32 dim 1 : vector<1x256xf32>, i32 -> vector<1x256xf32>
    %77 = vector.broadcast %75 : f32 to vector<1x256xf32>
    %78 = arith.mulf %77, %76 : vector<1x256xf32>
    %c14 = arith.constant 14 : index
    %79 = memref.load %arg1[%c14] : memref<19xf32, #tpu.memory_space<smem>>
    %c255_i32_21 = arith.constant 255 : i32
    %80 = tpu.dynamic_rotate %4 by %c255_i32_21 dim 1 : vector<1x256xf32>, i32 -> vector<1x256xf32>
    %81 = vector.broadcast %79 : f32 to vector<1x256xf32>
    %82 = arith.mulf %81, %80 : vector<1x256xf32>
    %83 = arith.addf %78, %82 : vector<1x256xf32>
    %cst_22 = arith.constant 0.000000e+00 : f32
    %84 = vector.broadcast %cst_22 : f32 to vector<1x256xf32>
    %85 = arith.select %14, %83, %84 : vector<1x256xi1>, vector<1x256xf32>
    %86 = arith.addf %74, %85 : vector<1x256xf32>
    %c6 = arith.constant 6 : index
    %87 = memref.load %arg1[%c6] : memref<19xf32, #tpu.memory_space<smem>>
    %c241_i32 = arith.constant 241 : i32
    %88 = tpu.dynamic_rotate %1 by %c241_i32 dim 1 : vector<1x256xf32>, i32 -> vector<1x256xf32>
    %89 = vector.broadcast %87 : f32 to vector<1x256xf32>
    %90 = arith.mulf %89, %88 : vector<1x256xf32>
    %c15 = arith.constant 15 : index
    %91 = memref.load %arg1[%c15] : memref<19xf32, #tpu.memory_space<smem>>
    %c241_i32_23 = arith.constant 241 : i32
    %92 = tpu.dynamic_rotate %4 by %c241_i32_23 dim 1 : vector<1x256xf32>, i32 -> vector<1x256xf32>
    %93 = vector.broadcast %91 : f32 to vector<1x256xf32>
    %94 = arith.mulf %93, %92 : vector<1x256xf32>
    %95 = arith.addf %90, %94 : vector<1x256xf32>
    %96 = arith.andi %10, %12 : vector<1x256xi1>
    %cst_24 = arith.constant 0.000000e+00 : f32
    %97 = vector.broadcast %cst_24 : f32 to vector<1x256xf32>
    %98 = arith.select %96, %95, %97 : vector<1x256xi1>, vector<1x256xf32>
    %99 = arith.addf %86, %98 : vector<1x256xf32>
    %c7 = arith.constant 7 : index
    %100 = memref.load %arg1[%c7] : memref<19xf32, #tpu.memory_space<smem>>
    %c240_i32 = arith.constant 240 : i32
    %101 = tpu.dynamic_rotate %1 by %c240_i32 dim 1 : vector<1x256xf32>, i32 -> vector<1x256xf32>
    %102 = vector.broadcast %100 : f32 to vector<1x256xf32>
    %103 = arith.mulf %102, %101 : vector<1x256xf32>
    %c16 = arith.constant 16 : index
    %104 = memref.load %arg1[%c16] : memref<19xf32, #tpu.memory_space<smem>>
    %c240_i32_25 = arith.constant 240 : i32
    %105 = tpu.dynamic_rotate %4 by %c240_i32_25 dim 1 : vector<1x256xf32>, i32 -> vector<1x256xf32>
    %106 = vector.broadcast %104 : f32 to vector<1x256xf32>
    %107 = arith.mulf %106, %105 : vector<1x256xf32>
    %108 = arith.addf %103, %107 : vector<1x256xf32>
    %cst_26 = arith.constant 0.000000e+00 : f32
    %109 = vector.broadcast %cst_26 : f32 to vector<1x256xf32>
    %110 = arith.select %10, %108, %109 : vector<1x256xi1>, vector<1x256xf32>
    %111 = arith.addf %99, %110 : vector<1x256xf32>
    %c8 = arith.constant 8 : index
    %112 = memref.load %arg1[%c8] : memref<19xf32, #tpu.memory_space<smem>>
    %c239_i32 = arith.constant 239 : i32
    %113 = tpu.dynamic_rotate %1 by %c239_i32 dim 1 : vector<1x256xf32>, i32 -> vector<1x256xf32>
    %114 = vector.broadcast %112 : f32 to vector<1x256xf32>
    %115 = arith.mulf %114, %113 : vector<1x256xf32>
    %c17 = arith.constant 17 : index
    %116 = memref.load %arg1[%c17] : memref<19xf32, #tpu.memory_space<smem>>
    %c239_i32_27 = arith.constant 239 : i32
    %117 = tpu.dynamic_rotate %4 by %c239_i32_27 dim 1 : vector<1x256xf32>, i32 -> vector<1x256xf32>
    %118 = vector.broadcast %116 : f32 to vector<1x256xf32>
    %119 = arith.mulf %118, %117 : vector<1x256xf32>
    %120 = arith.addf %115, %119 : vector<1x256xf32>
    %121 = arith.andi %10, %14 : vector<1x256xi1>
    %cst_28 = arith.constant 0.000000e+00 : f32
    %122 = vector.broadcast %cst_28 : f32 to vector<1x256xf32>
    %123 = arith.select %121, %120, %122 : vector<1x256xi1>, vector<1x256xf32>
    %124 = arith.addf %111, %123 : vector<1x256xf32>
    %125 = arith.negf %124 : vector<1x256xf32>
    %126 = math.exp %125 : vector<1x256xf32>
    %cst_29 = arith.constant 1.000000e+00 : f32
    %127 = vector.broadcast %cst_29 : f32 to vector<1x256xf32>
    %128 = arith.addf %127, %126 : vector<1x256xf32>
    %129 = arith.divf %127, %128 : vector<1x256xf32>
    %130 = vector.shape_cast %129 : vector<1x256xf32> to vector<1x1x256xf32>
    %131 = vector.shape_cast %130 : vector<1x1x256xf32> to vector<1x1x256xf32>
    %132 = vector.broadcast %131 : vector<1x1x256xf32> to vector<1x4x256xf32>
    %c0_30 = arith.constant 0 : index
    %c0_31 = arith.constant 0 : index
    %c0_32 = arith.constant 0 : index
    %133 = vector.load %arg4[%c0_30, %c0_31, %c0_32] : memref<1x4x256xf32, #tpu.memory_space<vmem>>, vector<1x4x256xf32>
    tpu.vector_store %arg4[%c0_30, %c0_31, %c0_32], %132 {strides = array<i32>} : memref<1x4x256xf32, #tpu.memory_space<vmem>>, vector<1x4x256xf32>,
    return
  }
  func.func @transform_0(%arg0: i32) -> i32 {
    %c0_i32 = arith.constant 0 : i32
    %c0_i32_0 = arith.constant 0 : i32
    return %c0_i32 : i32
  }
  func.func @transform_1(%arg0: i32) -> (i32, i32) {
    %c0_i32 = arith.constant 0 : i32
    %c0_i32_0 = arith.constant 0 : i32
    %c0_i32_1 = arith.constant 0 : i32
    return %c0_i32, %c0_i32_0 : i32, i32
  }
  func.func @transform_2(%arg0: i32) -> (i32, i32, i32) {
    %c0_i32 = arith.constant 0 : i32
    %c0_i32_0 = arith.constant 0 : i32
    %c0_i32_1 = arith.constant 0 : i32
    return %arg0, %c0_i32, %c0_i32_0 : i32, i32, i32
  }
  func.func @transform_3(%arg0: i32) -> (i32, i32, i32) {
    %c0_i32 = arith.constant 0 : i32
    %c0_i32_0 = arith.constant 0 : i32
    %c0_i32_1 = arith.constant 0 : i32
    return %arg0, %c0_i32, %c0_i32_0 : i32, i32, i32
  }
}

</mosaic_0001>

<llo_original>
// kernel: tpu_custom_call.1
$region0: #{tpu_custom_call.1}
  #allocation0 [shape = 'u32[]', space=smem, size = 0x4, offset = 0x4, fixed_abs, tag = 'smem constant byte address 0x4 - core index']
  #allocation1 [shape = 'u32[72,128]{1,0:T(1,128)}', space=vmem, size = 0x9000, scoped, tag = 'internal scratch']
  %s0 = inlined_call_operand.hbm [shape: f32[19], index: 0, kind: input, shape index: {}]
  %s1 = inlined_call_operand.hbm [shape: s32[2,256], index: 1, kind: input, shape index: {}]
  %s2 = inlined_call_operand.hbm [shape: f32[2,4,256], index: 2, kind: input, shape index: {}]
  %s3 = inlined_call_operand.hbm [shape: f32[2,4,256], index: 3, kind: output, shape index: {}]
  %s4 = sld [smem:[#allocation0]]
  $region57: #{tpu_custom_call.1} parent=0
    _
  %s6 = ssub.s32 1, %s4
  %s7 = scalar_select 0, %s6, %s4
  $region1: #{tpu_custom_call.1} parent=0
    #allocation2 [shape = 'u8[512]{0}', space=smem, size = 0x200, scoped, tag = 'input window, operand 0, single buffered']
    #allocation3 [shape = 's32[2]{0}', space=sflag, size = 0x8, scoped, tag = 'scoped memory for tpu_custom_call.1']
    #allocation4 [shape = 's32[2]{0}', space=sflag, size = 0x8, scoped, tag = 'scoped memory for tpu_custom_call.1']
    #allocation5 [shape = 's32[2]{0}', space=sflag, size = 0x8, scoped, tag = 'scoped memory for tpu_custom_call.1']
    #allocation6 [shape = 'u8[2048]{0}', space=vmem, size = 0x800, scoped, tag = 'input window, operand 1, single buffered']
    #allocation7 [shape = 'u8[8192]{0}', space=vmem, size = 0x2000, scoped, tag = 'input window, operand 2']
    #allocation8 [shape = 's32[2]{0}', space=sflag, size = 0x8, scoped, tag = 'scoped memory for tpu_custom_call.1']
    #allocation9 [shape = 'u8[8192]{0}', space=vmem, size = 0x2000, scoped, tag = 'output window, operand 0']
    %8 = vsyncpa [#allocation5], 0
    %9 = vsyncpa [#allocation3], 0
    %10 = vsyncpa [#allocation8], 0
    %s11 = scalar_lea.sflag [#allocation8], 1
    %12 = vsyncpa %s11, 0
    %13 = vsyncpa [#allocation4], 0
    %s14 = scalar_lea.sflag [#allocation4], 1
    %15 = vsyncpa %s14, 0
    loop: start=0, step=1, limit=4
    $region2: #{tpu_custom_call.1} parent=1 // loop_pre_header
      _
    $region3: #{tpu_custom_call.1} parent=1 // loop_header
      %s17 = sphi 0, %s21
      %p18 = scmp.ge.s32.totalorder %s17, 4
      %s25 = sphi 0, %s25
      %s27 = sphi 0, %s25
      %s28 = sphi 0, %s27
      %s42 = sphi 0, %s28
      %s46 = sphi 0, %s46
      %s48 = sphi 0, %s46
      %s49 = sphi 0, %s48
      %s63 = sphi 0, %s49
      %s69 = sphi 0, %s71
      %s72 = sphi 0, %s69
      %s73 = sphi 0, %s72
      %s89 = sphi 0, %s73
      %s95 = sphi 0, %s97
      %s98 = sphi 0, %s95
      %s99 = sphi 0, %s98
      %s115 = sphi 0, %s99
    $region4: #{tpu_custom_call.1} parent=1 // loop_header_branch
      %20 = sbr.rel (%p18) target = $region8
    $region5: #{tpu_custom_call.1} parent=1 // loop_body
      %s22 = ssub.s32 %s17, 1
      %s23 = ssub.s32 %s17, 2
      %s24 = sadd.s32 %s17, 1
      %s26 = sadd.s32 %s25, 1
      %p29 = scmp.eq.s32.totalorder %s17, 1
      %p30 = scmp.ne.s32.totalorder %s25, %s27
      %p31 = scmp.eq.s32.totalorder %s17, 0
      %p32 = por %p30, %p31
      %p33 = scmp.ne.s32.totalorder %s25, %s27
      %p34 = scmp.eq.s32.totalorder %s22, 1
      %p35 = por %p33, %p34
      %p36 = scmp.ne.s32.totalorder %s27, %s28
      %p37 = scmp.eq.s32.totalorder %s22, 0
      %p38 = por %p36, %p37
      %p39 = scmp.ne.s32.totalorder %s27, %s28
      %p40 = scmp.eq.s32.totalorder %s23, 1
      %p41 = por %p39, %p40
      %p43 = scmp.ne.s32.totalorder %s28, %s42
      %p44 = scmp.eq.s32.totalorder %s23, 0
      %p45 = por %p43, %p44
      %s47 = sadd.s32 %s46, 1
      %p50 = scmp.eq.s32.totalorder %s17, 1
      %p51 = scmp.ne.s32.totalorder %s46, %s48
      %p52 = scmp.eq.s32.totalorder %s17, 0
      %p53 = por %p51, %p52
      %p54 = scmp.ne.s32.totalorder %s46, %s48
      %p55 = scmp.eq.s32.totalorder %s22, 1
      %p56 = por %p54, %p55
      %p57 = scmp.ne.s32.totalorder %s48, %s49
      %p58 = scmp.eq.s32.totalorder %s22, 0
      %p59 = por %p57, %p58
      %p60 = scmp.ne.s32.totalorder %s48, %s49
      %p61 = scmp.eq.s32.totalorder %s23, 1
      %p62 = por %p60, %p61
      %p64 = scmp.ne.s32.totalorder %s49, %s63
      %p65 = scmp.eq.s32.totalorder %s23, 0
      %p66 = por %p64, %p65
      %s67 = ssub.s32 %s17, %s24
      %p68 = scmp.eq.s32.totalorder %s67, 0
      %s70 = sadd.s32 %s69, 1
      %s71 = scalar_select %p68, %s69, %s70
      %p74 = pneg %p68
      %p75 = scmp.eq.s32.totalorder %s17, 1
      %p76 = por %p74, %p75
      %p77 = scmp.ne.s32.totalorder %s69, %s72
      %p78 = scmp.eq.s32.totalorder %s17, 0
      %p79 = por %p77, %p78
      %p80 = scmp.ne.s32.totalorder %s69, %s72
      %p81 = scmp.eq.s32.totalorder %s22, 1
      %p82 = por %p80, %p81
      %p83 = scmp.ne.s32.totalorder %s72, %s73
      %p84 = scmp.eq.s32.totalorder %s22, 0
      %p85 = por %p83, %p84
      %p86 = scmp.ne.s32.totalorder %s72, %s73
      %p87 = scmp.eq.s32.totalorder %s23, 1
      %p88 = por %p86, %p87
      %p90 = scmp.ne.s32.totalorder %s73, %s89
      %p91 = scmp.eq.s32.totalorder %s23, 0
      %p92 = por %p90, %p91
      %s93 = ssub.s32 %s17, %s24
      %p94 = scmp.eq.s32.totalorder %s93, 0
      %s96 = sadd.s32 %s95, 1
      %s97 = scalar_select %p94, %s95, %s96
      %p100 = pneg %p94
      %p101 = scmp.eq.s32.totalorder %s17, 1
      %p102 = por %p100, %p101
      %p103 = scmp.ne.s32.totalorder %s95, %s98
      %p104 = scmp.eq.s32.totalorder %s17, 0
      %p105 = por %p103, %p104
      %p106 = scmp.ne.s32.totalorder %s95, %s98
      %p107 = scmp.eq.s32.totalorder %s22, 1
      %p108 = por %p106, %p107
      %p109 = scmp.ne.s32.totalorder %s98, %s99
      %p110 = scmp.eq.s32.totalorder %s22, 0
      %p111 = por %p109, %p110
      %p112 = scmp.ne.s32.totalorder %s98, %s99
      %p113 = scmp.eq.s32.totalorder %s23, 1
      %p114 = por %p112, %p113
      %p116 = scmp.ne.s32.totalorder %s99, %s115
      %p117 = scmp.eq.s32.totalorder %s23, 0
      %p118 = por %p116, %p117
      %p119 = scmp.le.s32.totalorder 1, %s17
      %p120 = scmp.lt.s32.totalorder %s17, 3
      %p121 = pnand %p119, %p120
      %p122 = pneg %p121
      // Predicated region
      $region9: #{tpu_custom_call.1} parent=5 // pred_check
        _
      $region10: #{tpu_custom_call.1} parent=5 // pred_check_branch
        %124 = sbr.rel (%p121) target = $region12
      $region11: #{tpu_custom_call.1} parent=5 // pred_region
        %s125 = ssub.s32 %s17, 1
        // Predicated region
        $region13: #{tpu_custom_call.1} parent=11 // pred_check
          %p126 = pneg %p38
        $region14: #{tpu_custom_call.1} parent=11 // pred_check_branch
          %128 = sbr.rel (%p126) target = $region16
        $region15: #{tpu_custom_call.1} parent=11 // pred_region
          %130 = vsyncadd [#allocation5], 0
          %s132 = sshll.u32 %s0, 4
          %s133 = int_to_ptr.hbm [resolvable:$true] %s132
          %135 = dma.hbm_to_smem %s133, 16, [#allocation2], [#allocation5]
        $region16: #{tpu_custom_call.1} parent=11 // pred_fallthru
          _
        // Predicated region
        $region17: #{tpu_custom_call.1} parent=11 // pred_check
          %p136 = pneg %p59
        $region18: #{tpu_custom_call.1} parent=11 // pred_check_branch
          %138 = sbr.rel (%p136) target = $region20
        $region19: #{tpu_custom_call.1} parent=11 // pred_region
          %140 = vsyncadd [#allocation3], 0
          %s142 = sshll.u32 %s1, 4
          %s143 = int_to_ptr.hbm [resolvable:$true] %s142
          %s144 = sshll.u32 [#allocation6], 4
          %s145 = int_to_ptr.vmem [resolvable:$true] %s144
          %147 = dma.hbm_to_vmem [thread:$0]  %s143, 64, %s145, [#allocation3]
        $region20: #{tpu_custom_call.1} parent=11 // pred_fallthru
          _
      $region12: #{tpu_custom_call.1} parent=5 // pred_fallthru
        _
      %p148 = scmp.lt.s32.totalorder %s17, 2
      // Predicated region
      $region21: #{tpu_custom_call.1} parent=5 // pred_check
        %p149 = pneg %p148
      $region22: #{tpu_custom_call.1} parent=5 // pred_check_branch
        %151 = sbr.rel (%p149) target = $region24
      $region23: #{tpu_custom_call.1} parent=5 // pred_region
        // Predicated region
        $region25: #{tpu_custom_call.1} parent=23 // pred_check
          %p152 = pneg %p79
        $region26: #{tpu_custom_call.1} parent=23 // pred_check_branch
          %154 = sbr.rel (%p152) target = $region28
        $region27: #{tpu_custom_call.1} parent=23 // pred_region
          %s155 = sand.u32 %s69, 1
          %s156 = scalar_lea.sflag [#allocation8], %s155
          %s157 = sand.u32 %s69, 1
          %s158 = smul.addr %s157, 8
          %s159 = scalar_lea.vmem [#allocation7], %s158
          %161 = vsyncadd %s156, 0
          %s162 = smul.addr %s17, 2
          %s163 = smul.addr %s162, 4
          %s164 = scalar_lea.hbm %s2, %s163
          %s166 = sshll.u32 %s164, 4
          %s167 = int_to_ptr.hbm [resolvable:$true] %s166
          %s168 = sshll.u32 %s159, 4
          %s169 = int_to_ptr.vmem [resolvable:$true] %s168
          %171 = dma.hbm_to_vmem [thread:$0]  %s167, 128, %s169, %s156
        $region28: #{tpu_custom_call.1} parent=23 // pred_fallthru
          _
      $region24: #{tpu_custom_call.1} parent=5 // pred_fallthru
        _
      %p172 = scmp.le.s32.totalorder 1, %s17
      %p173 = scmp.lt.s32.totalorder %s17, 3
      %p174 = pnand %p172, %p173
      %p175 = pneg %p174
      // Predicated region
      $region29: #{tpu_custom_call.1} parent=5 // pred_check
        _
      $region30: #{tpu_custom_call.1} parent=5 // pred_check_branch
        %177 = sbr.rel (%p174) target = $region32
      $region31: #{tpu_custom_call.1} parent=5 // pred_region
        %s178 = ssub.s32 %s17, 1
        // Predicated region
        $region33: #{tpu_custom_call.1} parent=31 // pred_check
          %p179 = pneg %p38
        $region34: #{tpu_custom_call.1} parent=31 // pred_check_branch
          %181 = sbr.rel (%p179) target = $region36
        $region35: #{tpu_custom_call.1} parent=31 // pred_region
          %183 = dma.done [#allocation5], 16
        $region36: #{tpu_custom_call.1} parent=31 // pred_fallthru
          _
        // Predicated region
        $region37: #{tpu_custom_call.1} parent=31 // pred_check
          %p184 = pneg %p59
        $region38: #{tpu_custom_call.1} parent=31 // pred_check_branch
          %186 = sbr.rel (%p184) target = $region40
        $region39: #{tpu_custom_call.1} parent=31 // pred_region
          %188 = dma.done [#allocation3], 64
        $region40: #{tpu_custom_call.1} parent=31 // pred_fallthru
          _
        %s189 = sand.u32 %s72, 1
        %s190 = scalar_lea.sflag [#allocation8], %s189
        %s191 = sand.u32 %s72, 1
        %s192 = smul.addr %s191, 8
        %s193 = scalar_lea.vmem [#allocation7], %s192
        // Predicated region
        $region41: #{tpu_custom_call.1} parent=31 // pred_check
          %p194 = pneg %p85
        $region42: #{tpu_custom_call.1} parent=31 // pred_check_branch
          %196 = sbr.rel (%p194) target = $region44
        $region43: #{tpu_custom_call.1} parent=31 // pred_region
          %198 = dma.done %s190, 128
        $region44: #{tpu_custom_call.1} parent=31 // pred_fallthru
          _
        %199 = sfence
        %p200 = pneg %p38
        %p201 = pneg %p35
        %p202 = pneg %p59
        %p203 = pneg %p56
        %s204 = sand.u32 %s72, 1
        %s205 = scalar_lea.sflag [#allocation8], %s204
        %s206 = sand.u32 %s72, 1
        %s207 = smul.addr %s206, 8
        %s208 = scalar_lea.vmem [#allocation7], %s207
        %p209 = pneg %p85
        %p210 = pneg %p82
        %p211 = pneg %p111
        %p212 = pneg %p108
        %s213 = sand.u32 %s98, 1
        %s214 = scalar_lea.sflag [#allocation4], %s213
        %s215 = sand.u32 %s98, 1
        %s216 = smul.addr %s215, 8
        %s217 = scalar_lea.vmem [#allocation9], %s216
        %v218 = vld [vmem:[%s193] sm:$0xff]
        %220 = vst [vmem:[#allocation1] ss:$2 sm:$0xff] %v218
        %v221 = vld.sshfl [vmem:[#allocation1] sm:$0xff pattern:$0x75316420]
        %v222 = vld.sshfl [vmem:[#allocation1 + $0x8] sm:$0xff pattern:$0x75316420]
        %vm225 = vcmask 1043456
        %v226 = vsel %vm225, %v221, -inf
        %v227 = vrot.slane %v226, 4
        %v228 = vmax.f32 %v226, %v227
        %v229 = vrot.slane %v228, 2
        %v230 = vmax.f32 %v228, %v229
        %v231 = vrot.slane %v230, 1
        %v232 = vmax.f32 %v230, %v231
        %v233 = vsel %vm225, %v222, -inf
        %v234 = vrot.slane %v233, 4
        %v235 = vmax.f32 %v233, %v234
        %v236 = vrot.slane %v235, 2
        %v237 = vmax.f32 %v235, %v236
        %v238 = vrot.slane %v237, 1
        %v239 = vmax.f32 %v237, %v238
        %240 = vst [vmem:[#allocation1] ss:$2 sm:$0xff] %v218
        %v241 = vld.sshfl [vmem:[#allocation1] sm:$0xff pattern:$0x75316420]
        %v242 = vld.sshfl [vmem:[#allocation1 + $0x8] sm:$0xff pattern:$0x75316420]
        %v245 = vsel %vm225, %v241, 0.0
        %v246 = vrot.slane %v245, 4
        %v247 = vadd.f32 %v245, %v246
        %v248 = vrot.slane %v247, 2
        %v249 = vadd.f32 %v247, %v248
        %v250 = vrot.slane %v249, 1
        %v251 = vadd.f32 %v249, %v250
        %v252 = vsel %vm225, %v242, 0.0
        %v253 = vrot.slane %v252, 4
        %v254 = vadd.f32 %v252, %v253
        %v255 = vrot.slane %v254, 2
        %v256 = vadd.f32 %v254, %v255
        %v257 = vrot.slane %v256, 1
        %v258 = vadd.f32 %v256, %v257
        %v259 = vmul.f32 %v251, 0.25
        %v260 = vmul.f32 %v258, 0.25
        %v261 = vld [vmem:[#allocation6] ss:$2 sm:$0x3]
        %s262 = scalar_lea.vmem [#allocation6], 1
        %v263 = vld [vmem:[%s262] ss:$2 sm:$0x3]
        %vm264 = vcmp.ge.s32.totalorder %v261, 1
        %vm265 = vcmp.lt.s32.totalorder %v261, 15
        %vm266 = vcmp.ge.s32.totalorder %v263, 1
        %vm267 = vcmp.lt.s32.totalorder %v263, 15
        %s268 = sld [smem:[#allocation2 + $0x12]]
        %v269 = vstv %s268
        %s270 = sld [smem:[#allocation2]]
        %271 = vrot.lane.b32.xlu0 %v232, 17
        %v272 = vpop.permute.xlu0 %271
        %273 = vrot.lane.b32.xlu0 %v239, 17
        %v274 = vpop.permute.xlu0 %273
        %v275 = vlaneseq
        %v276 = vand.u32 %v275, 127
        %vm277 = vcmp.lt.s32.totalorder %v276, 17
        %v278 = vsel %vm277, %v272, %v274
        %v279 = vsel %vm277, %v274, %v272
        %v280 = vstv %s270
        %v281 = vmul.f32 %v280, %v279
        %v282 = vmul.f32 %v280, %v278
        %s283 = sld [smem:[#allocation2 + $0x9]]
        %284 = vrot.lane.b32.xlu0 %v259, 17
        %v285 = vpop.permute.xlu0 %284
        %286 = vrot.lane.b32.xlu0 %v260, 17
        %v287 = vpop.permute.xlu0 %286
        %v288 = vsel %vm277, %v285, %v287
        %v289 = vsel %vm277, %v287, %v285
        %v290 = vstv %s283
        %v291 = vmul.f32 %v290, %v289
        %v292 = vmul.f32 %v290, %v288
        %v293 = vadd.f32 %v281, %v291
        %v294 = vadd.f32 %v282, %v292
        %vm295 = vmand %vm264, %vm266
        %v298 = vrot.slane %v294, 7
        %vm299 = vcmask 1040384
        %v300 = vsel %vm299, %v293, %v298
        %v302 = vsel %vm295, %v300, 0.0
        %v303 = vadd.f32 %v269, %v302
        %s304 = sld [smem:[#allocation2 + $0x1]]
        %305 = vrot.lane.b32.xlu0 %v232, 16
        %v306 = vpop.permute.xlu0 %305
        %307 = vrot.lane.b32.xlu0 %v239, 16
        %v308 = vpop.permute.xlu0 %307
        %vm309 = vcmp.lt.s32.totalorder %v276, 16
        %v310 = vsel %vm309, %v306, %v308
        %v311 = vsel %vm309, %v308, %v306
        %v312 = vstv %s304
        %v313 = vmul.f32 %v312, %v311
        %v314 = vmul.f32 %v312, %v310
        %s315 = sld [smem:[#allocation2 + $0xa]]
        %316 = vrot.lane.b32.xlu0 %v259, 16
        %v317 = vpop.permute.xlu0 %316
        %318 = vrot.lane.b32.xlu0 %v260, 16
        %v319 = vpop.permute.xlu0 %318
        %v320 = vsel %vm309, %v317, %v319
        %v321 = vsel %vm309, %v319, %v317
        %v322 = vstv %s315
        %v323 = vmul.f32 %v322, %v321
        %v324 = vmul.f32 %v322, %v320
        %v325 = vadd.f32 %v313, %v323
        %v326 = vadd.f32 %v314, %v324
        %v329 = vrot.slane %v326, 7
        %v330 = vsel %vm299, %v325, %v329
        %v332 = vsel %vm264, %v330, 0.0
        %v333 = vadd.f32 %v303, %v332
        %s334 = sld [smem:[#allocation2 + $0x2]]
        %335 = vrot.lane.b32.xlu0 %v232, 15
        %v336 = vpop.permute.xlu0 %335
        %337 = vrot.lane.b32.xlu0 %v239, 15
        %v338 = vpop.permute.xlu0 %337
        %vm339 = vcmp.lt.s32.totalorder %v276, 15
        %v340 = vsel %vm339, %v336, %v338
        %v341 = vsel %vm339, %v338, %v336
        %v342 = vstv %s334
        %v343 = vmul.f32 %v342, %v341
        %v344 = vmul.f32 %v342, %v340
        %s345 = sld [smem:[#allocation2 + $0xb]]
        %346 = vrot.lane.b32.xlu0 %v259, 15
        %v347 = vpop.permute.xlu0 %346
        %348 = vrot.lane.b32.xlu0 %v260, 15
        %v349 = vpop.permute.xlu0 %348
        %v350 = vsel %vm339, %v347, %v349
        %v351 = vsel %vm339, %v349, %v347
        %v352 = vstv %s345
        %v353 = vmul.f32 %v352, %v351
        %v354 = vmul.f32 %v352, %v350
        %v355 = vadd.f32 %v343, %v353
        %v356 = vadd.f32 %v344, %v354
        %vm357 = vmand %vm264, %vm267
        %v360 = vrot.slane %v356, 7
        %v361 = vsel %vm299, %v355, %v360
        %v363 = vsel %vm357, %v361, 0.0
        %v364 = vadd.f32 %v333, %v363
        %s365 = sld [smem:[#allocation2 + $0x3]]
        %366 = vrot.lane.b32.xlu0 %v232, 1
        %v367 = vpop.permute.xlu0 %366
        %368 = vrot.lane.b32.xlu0 %v239, 1
        %v369 = vpop.permute.xlu0 %368
        %vm370 = vcmp.lt.s32.totalorder %v276, 1
        %v371 = vsel %vm370, %v367, %v369
        %v372 = vsel %vm370, %v369, %v367
        %v373 = vstv %s365
        %v374 = vmul.f32 %v373, %v372
        %v375 = vmul.f32 %v373, %v371
        %s376 = sld [smem:[#allocation2 + $0xc]]
        %377 = vrot.lane.b32.xlu0 %v259, 1
        %v378 = vpop.permute.xlu0 %377
        %379 = vrot.lane.b32.xlu0 %v260, 1
        %v380 = vpop.permute.xlu0 %379
        %v381 = vsel %vm370, %v378, %v380
        %v382 = vsel %vm370, %v380, %v378
        %v383 = vstv %s376
        %v384 = vmul.f32 %v383, %v382
        %v385 = vmul.f32 %v383, %v381
        %v386 = vadd.f32 %v374, %v384
        %v387 = vadd.f32 %v375, %v385
        %v390 = vrot.slane %v387, 7
        %v391 = vsel %vm299, %v386, %v390
        %v393 = vsel %vm266, %v391, 0.0
        %v394 = vadd.f32 %v364, %v393
        %s395 = sld [smem:[#allocation2 + $0x4]]
        %v396 = vstv %s395
        %v397 = vmul.f32 %v396, %v232
        %v398 = vmul.f32 %v396, %v239
        %s399 = sld [smem:[#allocation2 + $0xd]]
        %v400 = vstv %s399
        %v401 = vmul.f32 %v400, %v259
        %v402 = vmul.f32 %v400, %v260
        %v403 = vadd.f32 %v397, %v401
        %v404 = vadd.f32 %v398, %v402
        %v407 = vrot.slane %v404, 7
        %v408 = vsel %vm299, %v403, %v407
        %v410 = vadd.f32 %v394, %v408
        %s411 = sld [smem:[#allocation2 + $0x5]]
        %412 = vrot.lane.b32.xlu0 %v232, 127
        %v413 = vpop.permute.xlu0 %412
        %414 = vrot.lane.b32.xlu0 %v239, 127
        %v415 = vpop.permute.xlu0 %414
        %vm416 = vcmp.lt.s32.totalorder %v276, 127
        %v417 = vsel %vm416, %v413, %v415
        %v418 = vsel %vm416, %v415, %v413
        %v419 = vstv %s411
        %v420 = vmul.f32 %v419, %v417
        %v421 = vmul.f32 %v419, %v418
        %s422 = sld [smem:[#allocation2 + $0xe]]
        %423 = vrot.lane.b32.xlu0 %v259, 127
        %v424 = vpop.permute.xlu0 %423
        %425 = vrot.lane.b32.xlu0 %v260, 127
        %v426 = vpop.permute.xlu0 %425
        %v427 = vsel %vm416, %v424, %v426
        %v428 = vsel %vm416, %v426, %v424
        %v429 = vstv %s422
        %v430 = vmul.f32 %v429, %v427
        %v431 = vmul.f32 %v429, %v428
        %v432 = vadd.f32 %v420, %v430
        %v433 = vadd.f32 %v421, %v431
        %v436 = vrot.slane %v433, 7
        %v437 = vsel %vm299, %v432, %v436
        %v439 = vsel %vm267, %v437, 0.0
        %v440 = vadd.f32 %v410, %v439
        %s441 = sld [smem:[#allocation2 + $0x6]]
        %442 = vrot.lane.b32.xlu0 %v232, 113
        %v443 = vpop.permute.xlu0 %442
        %444 = vrot.lane.b32.xlu0 %v239, 113
        %v445 = vpop.permute.xlu0 %444
        %vm446 = vcmp.lt.s32.totalorder %v276, 113
        %v447 = vsel %vm446, %v443, %v445
        %v448 = vsel %vm446, %v445, %v443
        %v449 = vstv %s441
        %v450 = vmul.f32 %v449, %v447
        %v451 = vmul.f32 %v449, %v448
        %s452 = sld [smem:[#allocation2 + $0xf]]
        %453 = vrot.lane.b32.xlu0 %v259, 113
        %v454 = vpop.permute.xlu0 %453
        %455 = vrot.lane.b32.xlu0 %v260, 113
        %v456 = vpop.permute.xlu0 %455
        %v457 = vsel %vm446, %v454, %v456
        %v458 = vsel %vm446, %v456, %v454
        %v459 = vstv %s452
        %v460 = vmul.f32 %v459, %v457
        %v461 = vmul.f32 %v459, %v458
        %v462 = vadd.f32 %v450, %v460
        %v463 = vadd.f32 %v451, %v461
        %vm464 = vmand %vm265, %vm266
        %v467 = vrot.slane %v463, 7
        %v468 = vsel %vm299, %v462, %v467
        %v470 = vsel %vm464, %v468, 0.0
        %v471 = vadd.f32 %v440, %v470
        %s472 = sld [smem:[#allocation2 + $0x7]]
        %473 = vrot.lane.b32.xlu0 %v232, 112
        %v474 = vpop.permute.xlu0 %473
        %475 = vrot.lane.b32.xlu0 %v239, 112
        %v476 = vpop.permute.xlu0 %475
        %vm477 = vcmp.lt.s32.totalorder %v276, 112
        %v478 = vsel %vm477, %v474, %v476
        %v479 = vsel %vm477, %v476, %v474
        %v480 = vstv %s472
        %v481 = vmul.f32 %v480, %v478
        %v482 = vmul.f32 %v480, %v479
        %s483 = sld [smem:[#allocation2 + $0x10]]
        %484 = vrot.lane.b32.xlu0 %v259, 112
        %v485 = vpop.permute.xlu0 %484
        %486 = vrot.lane.b32.xlu0 %v260, 112
        %v487 = vpop.permute.xlu0 %486
        %v488 = vsel %vm477, %v485, %v487
        %v489 = vsel %vm477, %v487, %v485
        %v490 = vstv %s483
        %v491 = vmul.f32 %v490, %v488
        %v492 = vmul.f32 %v490, %v489
        %v493 = vadd.f32 %v481, %v491
        %v494 = vadd.f32 %v482, %v492
        %v497 = vrot.slane %v494, 7
        %v498 = vsel %vm299, %v493, %v497
        %v500 = vsel %vm265, %v498, 0.0
        %v501 = vadd.f32 %v471, %v500
        %s502 = sld [smem:[#allocation2 + $0x8]]
        %503 = vrot.lane.b32.xlu0 %v232, 111
        %v504 = vpop.permute.xlu0 %503
        %505 = vrot.lane.b32.xlu0 %v239, 111
        %v506 = vpop.permute.xlu0 %505
        %vm507 = vcmp.lt.s32.totalorder %v276, 111
        %v508 = vsel %vm507, %v504, %v506
        %v509 = vsel %vm507, %v506, %v504
        %v510 = vstv %s502
        %v511 = vmul.f32 %v510, %v508
        %v512 = vmul.f32 %v510, %v509
        %s513 = sld [smem:[#allocation2 + $0x11]]
        %514 = vrot.lane.b32.xlu0 %v259, 111
        %v515 = vpop.permute.xlu0 %514
        %516 = vrot.lane.b32.xlu0 %v260, 111
        %v517 = vpop.permute.xlu0 %516
        %v518 = vsel %vm507, %v515, %v517
        %v519 = vsel %vm507, %v517, %v515
        %v520 = vstv %s513
        %v521 = vmul.f32 %v520, %v518
        %v522 = vmul.f32 %v520, %v519
        %v523 = vadd.f32 %v511, %v521
        %v524 = vadd.f32 %v512, %v522
        %vm525 = vmand %vm265, %vm267
        %v528 = vrot.slane %v524, 7
        %v529 = vsel %vm299, %v523, %v528
        %v531 = vsel %vm525, %v529, 0.0
        %v532 = vadd.f32 %v501, %v531
        %v533 = vxor.u32 %v532, 2147483648
        %v534 = vmul.f32 %v533, 1.442695
        %v535 = vpow.pop %v534
        %v536 = vadd.f32 %v535, 1.0
        %v537 = vrcp.pop %v536
        %v538 = vmul.f32 %v536, %v537
        %v539 = vsub.f32 1.0, %v538
        %v540 = vmul.f32 %v537, %v539
        %v541 = vadd.f32 %v537, %v540
        %vm542 = vweird.f32 %v536
        %vm543 = vweird.f32 %v537
        %vm544 = vmor %vm542, %vm543
        %v545 = vsel %vm544, %v537, %v541
        %v546 = vand.u32 2147483647, %v536
        %vm547 = vcmp.eq.f32.partialorder %v546, 8.507059e+37
        %v548 = vand.u32 %v536, 2147483648
        %v549 = vor.u32 1.1754944e-38, %v548
        %v550 = vsel %vm547, %v549, %v545
        %v551 = vmul.f32 1.0, %v550
        %v553 = vperm.slane %v551, 0
        %v554 = vperm.slane %v551, 1
        %v555 = vrot.slane %v554, 4
        %v556 = vsel %vm225, %v553, %v555
        %558 = vst [vmem:[%s217] sm:$0xff] %v556
        %s559 = sand.u32 %s98, 1
        %s560 = scalar_lea.sflag [#allocation4], %s559
        %s561 = sand.u32 %s98, 1
        %s562 = smul.addr %s561, 8
        %s563 = scalar_lea.vmem [#allocation9], %s562
        // Predicated region
        $region45: #{tpu_custom_call.1} parent=31 // pred_check
          %p564 = pneg %p108
        $region46: #{tpu_custom_call.1} parent=31 // pred_check_branch
          %566 = sbr.rel (%p564) target = $region48
        $region47: #{tpu_custom_call.1} parent=31 // pred_region
          %568 = vsyncadd %s560, 0
          %s569 = smul.addr %s22, 2
          %s570 = smul.addr %s569, 4
          %s571 = scalar_lea.hbm %s3, %s570
          %s573 = sshll.u32 %s563, 4
          %s574 = int_to_ptr.vmem [resolvable:$true] %s573
          %s575 = sshll.u32 %s571, 4
          %s576 = int_to_ptr.hbm [resolvable:$true] %s575
          %578 = dma.vmem_to_hbm [thread:$0]  %s574, 128, %s576, %s560
        $region48: #{tpu_custom_call.1} parent=31 // pred_fallthru
          _
      $region32: #{tpu_custom_call.1} parent=5 // pred_fallthru
        _
      %p579 = scmp.le.s32.totalorder 2, %s17
      // Predicated region
      $region49: #{tpu_custom_call.1} parent=5 // pred_check
        %p580 = pneg %p579
      $region50: #{tpu_custom_call.1} parent=5 // pred_check_branch
        %582 = sbr.rel (%p580) target = $region52
      $region51: #{tpu_custom_call.1} parent=5 // pred_region
        %s583 = ssub.s32 %s17, 2
        // Predicated region
        $region53: #{tpu_custom_call.1} parent=51 // pred_check
          %p584 = pneg %p114
        $region54: #{tpu_custom_call.1} parent=51 // pred_check_branch
          %586 = sbr.rel (%p584) target = $region56
        $region55: #{tpu_custom_call.1} parent=51 // pred_region
          %s587 = sand.u32 %s99, 1
          %s588 = scalar_lea.sflag [#allocation4], %s587
          %s589 = sand.u32 %s99, 1
          %s590 = smul.addr %s589, 8
          %s591 = scalar_lea.vmem [#allocation9], %s590
          %593 = dma.done %s588, 128
        $region56: #{tpu_custom_call.1} parent=51 // pred_fallthru
          _
      $region52: #{tpu_custom_call.1} parent=5 // pred_fallthru
        _
    $region6: #{tpu_custom_call.1} parent=1 // loop_footer
      %s21 = sadd.s32 1, %s17
    $region7: #{tpu_custom_call.1} parent=1 // loop_footer_branch
      %16 = sbr.rel target = $region3
    $region8: #{tpu_custom_call.1} parent=1 // loop_exit
      _
    %594 = vsyncpa [#allocation3], 1
    %s595 = scalar_lea.sflag [#allocation3], 1
    %596 = vsyncpa %s595, 1
    %597 = vsyncpa [#allocation8], 1
    %s598 = scalar_lea.sflag [#allocation8], 1
    %599 = vsyncpa %s598, 1
    %600 = vsyncpa [#allocation4], 1
    %s601 = scalar_lea.sflag [#allocation4], 1
    %602 = vsyncpa %s601, 1
    %603 = vsyncpa [#allocation5], 1
    %s604 = scalar_lea.sflag [#allocation5], 1
    %605 = vsyncpa %s604, 1

</llo_original>
